<compile_context>
chip_gen: v7x
topology: tpu7x:2x2x1
jax: 0.10.0
libtpu: 0.0.40
codegen_flags: <defaults>
</compile_context>

<pallas_src>
import functools

import jax
import jax.numpy as jnp
from jax import lax
from jax.experimental import pallas as pl
from jax.experimental.pallas import tpu as pltpu


def _round_up(n: int, m: int) -> int:
    return ((n + m - 1) // m) * m


def _cdiv(a: int, b: int) -> int:
    return -(-a // b)


def residual_block_kernel(x_ref, w1_ref, b1_ref, w2_ref, b2_ref, o_ref):
    """One (TM, Fp) batch tile: out = x + (relu(x @ W1 + b1) @ W2 + b2).

    w1_ref / w2_ref are already transposed to (in, out) layout by the wrapper,
    so both matmuls contract (last dim of LHS, first dim of RHS) — the MXU sees
    a canonical contraction and no per-step weight relayout is needed.
    """
    x = x_ref[...]                                   # (TM, Fp), streaming dtype
    xc = x if x.dtype == w1_ref.dtype else x.astype(w1_ref.dtype)

    # h = x @ W1 + b1 ; accumulate in f32 on the MXU.
    h = lax.dot_general(
        xc, w1_ref[...],
        dimension_numbers=(((1,), (0,)), ((), ())),
        preferred_element_type=jnp.float32,
    ) + b1_ref[...]
    h = jnp.maximum(h, 0.0)                          # ReLU in f32

    # y = h @ W2 + b2 ; matmul operands in compute dtype, accumulate f32.
    y = lax.dot_general(
        h.astype(w2_ref.dtype), w2_ref[...],
        dimension_numbers=(((1,), (0,)), ((), ())),
        preferred_element_type=jnp.float32,
    ) + b2_ref[...]

    # Residual add in f32, store in the output dtype.
    o_ref[...] = (x.astype(jnp.float32) + y).astype(o_ref.dtype)


@functools.partial(
    jax.jit, static_argnames=("compute_dtype", "tm", "bf16_activations")
)
def residual_block(x, w1, b1, w2, b2, *, compute_dtype=jnp.bfloat16, tm=512,
                   bf16_activations=False):
    """x: (B, F); w1, w2: (F, F) in PyTorch (out, in) layout; b1, b2: (F,)."""
    B, F = x.shape

    # Lane-dense feature dim.
    Fp = _round_up(F, 128)

    # Divisor-aware batch tile: >= 2 grid steps (v7x megacore sharding of the
    # "parallel" axis), TM a multiple of 8 (f32 sublanes), padding < 8 rows/step.
    tm_cap = max(8, (int(tm) // 8) * 8)
    nt = max(2, _cdiv(B, tm_cap))
    TM = _round_up(_cdiv(B, nt), 8)
    Bp = _round_up(B, TM)

    # Zero-padding is exact for this block: padded cols stay 0 through both
    # linears + residual; padded rows are sliced off after the call.
    x_stream_dtype = jnp.dtype(compute_dtype) if bf16_activations else x.dtype
    x_p = jnp.pad(x, ((0, Bp - B), (0, Fp - F))).astype(x_stream_dtype)

    def prep_w(w):
        # Transpose to (in, out) + pad + cast: one fused XLA op, done once.
        return jnp.pad(w.T, ((0, Fp - F), (0, Fp - F))).astype(compute_dtype)

    def prep_b(b):
        return jnp.pad(b, ((0, Fp - F),)).reshape(1, Fp).astype(jnp.float32)

    w1_p, w2_p = prep_w(w1), prep_w(w2)
    b1_p, b2_p = prep_b(b1), prep_b(b2)

    # VMEM budget: double-buffered activation tiles, single-buffered weights /
    # biases (Buffered(1)), plus in-kernel temporaries (compute-dtype x copy,
    # f32 h / y / residual).  Cap against the actual chip VMEM with headroom.
    cb = jnp.dtype(compute_dtype).itemsize
    xb = jnp.dtype(x_stream_dtype).itemsize
    ob = jnp.dtype(x.dtype).itemsize
    act_bytes = 2 * TM * Fp * (xb + ob)            # x / out tiles, double-buffered
    weight_bytes = 2 * Fp * Fp * cb + 2 * Fp * 4   # W1, W2, b1, b2, single-buffered
    tmp_bytes = TM * Fp * (cb + 3 * 4)             # xc + h + y + residual temp
    vmem_need = act_bytes + weight_bytes + tmp_bytes
    try:
        vmem_cap = int(pltpu.get_tpu_info().vmem_capacity_bytes)
    except Exception:  # interpret mode / older API — fall back conservatively.
        vmem_cap = 128 * 1024 * 1024
    vmem_limit = int(min(max(int(vmem_need * 1.25), 32 * 1024 * 1024),
                         int(vmem_cap * 0.85)))

    resident = dict(pipeline_mode=pl.Buffered(1))  # grid-invariant blocks
    grid = (Bp // TM,)
    out = pl.pallas_call(
        residual_block_kernel,
        out_shape=jax.ShapeDtypeStruct((Bp, Fp), x.dtype),
        grid_spec=pltpu.PrefetchScalarGridSpec(
            num_scalar_prefetch=0,
            grid=grid,
            in_specs=[
                pl.BlockSpec((TM, Fp), lambda i: (i, 0)),                # x tile
                pl.BlockSpec((Fp, Fp), lambda i: (0, 0), **resident),    # W1
                pl.BlockSpec((1, Fp), lambda i: (0, 0), **resident),     # b1
                pl.BlockSpec((Fp, Fp), lambda i: (0, 0), **resident),    # W2
                pl.BlockSpec((1, Fp), lambda i: (0, 0), **resident),     # b2
            ],
            out_specs=pl.BlockSpec((TM, Fp), lambda i: (i, 0)),
        ),
        compiler_params=pltpu.CompilerParams(
            dimension_semantics=("parallel",),
            vmem_limit_bytes=vmem_limit,
        ),
    )(x_p, w1_p, b1_p, w2_p, b2_p)

    return out[:B, :F]


def _init_linear_params(key, features):
    """Deterministic init mimicking nn.Linear default: U(-1/sqrt(F), 1/sqrt(F))."""
    kw, kb = jax.random.split(key)
    bound = 1.0 / jnp.sqrt(jnp.float32(features))
    w = jax.random.uniform(kw, (features, features), jnp.float32, -bound, bound)
    b = jax.random.uniform(kb, (features,), jnp.float32, -bound, bound)
    return w, b


def residual_block_reference(x, w1, b1, w2, b2):
    """Pure-JAX reference matching PyTorch semantics (f32 throughout)."""
    h = jnp.maximum(x @ w1.T + b1, 0.0)
    y = h @ w2.T + b2
    return x + y


if __name__ == "__main__":
    batch, features = 24, 32

    key = jax.random.PRNGKey(0)
    k_x, k_l1, k_l2 = jax.random.split(key, 3)

    x = jax.random.normal(k_x, (batch, features), jnp.float32)
    w1, b1 = _init_linear_params(k_l1, features)
    w2, b2 = _init_linear_params(k_l2, features)

    ref = residual_block_reference(x, w1, b1, w2, b2)

    # 1) f32 compute path (2-step batch grid from the >=2-tile rule).
    out_f32 = jax.block_until_ready(
        residual_block(x, w1, b1, w2, b2, compute_dtype=jnp.float32)
    )
    assert out_f32.shape == (batch, features)
    assert jnp.allclose(out_f32, ref, atol=1e-5, rtol=1e-5), "f32 mismatch vs reference"

    # 2) bf16 MXU operands + small tiles (tm=8 -> 3-step batch grid).
    out_bf16 = jax.block_until_ready(
        residual_block(x, w1, b1, w2, b2, compute_dtype=jnp.bfloat16, tm=8)
    )
    assert out_bf16.shape == (batch, features)
    assert jnp.allclose(out_bf16, ref, atol=5e-2, rtol=5e-2), "bf16 mismatch vs reference"

    # 3) bf16 activation-streaming path (halves HBM traffic in the mem-bound regime).
    out_bf16_act = jax.block_until_ready(
        residual_block(x, w1, b1, w2, b2, compute_dtype=jnp.bfloat16,
                       bf16_activations=True)
    )
    assert out_bf16_act.shape == (batch, features)
    assert jnp.allclose(out_bf16_act, ref, atol=1e-1, rtol=1e-1), \
        "bf16-activation mismatch vs reference"

    print("KERNEL_OK")
</pallas_src>

<mosaic_0001>
module attributes {stable_mosaic.version = 11 : i64} {
  func.func @residual_block_kernel(%arg0: i32, %arg1: memref<16x128xf32, #tpu.memory_space<vmem>>, %arg2: memref<128x128xf32, #tpu.memory_space<vmem>>, %arg3: memref<1x128xf32, #tpu.memory_space<vmem>>, %arg4: memref<128x128xf32, #tpu.memory_space<vmem>>, %arg5: memref<1x128xf32, #tpu.memory_space<vmem>>, %arg6: memref<16x128xf32, #tpu.memory_space<vmem>>) attributes {dimension_semantics = [#tpu.dimension_semantics<parallel>], iteration_bounds = array<i64: 2>, scalar_prefetch = 0 : i64, scratch_operands = 0 : i64, tpu.core_type = #tpu.core_type<tc>, window_params = [{transform_indices = @transform_0, window_bounds = array<i64: 16, 128>}, {pipeline_mode = #tpu.pipeline_mode<synchronous>, transform_indices = @transform_1, window_bounds = array<i64: 128, 128>}, {pipeline_mode = #tpu.pipeline_mode<synchronous>, transform_indices = @transform_2, window_bounds = array<i64: 1, 128>}, {pipeline_mode = #tpu.pipeline_mode<synchronous>, transform_indices = @transform_3, window_bounds = array<i64: 128, 128>}, {pipeline_mode = #tpu.pipeline_mode<synchronous>, transform_indices = @transform_4, window_bounds = array<i64: 1, 128>}, {transform_indices = @transform_5, window_bounds = array<i64: 16, 128>}]} {
    %c0 = arith.constant 0 : index
    %c0_0 = arith.constant 0 : index
    %0 = vector.load %arg1[%c0, %c0_0] : memref<16x128xf32, #tpu.memory_space<vmem>>, vector<16x128xf32>
    %c0_1 = arith.constant 0 : index
    %c0_2 = arith.constant 0 : index
    %1 = vector.load %arg2[%c0_1, %c0_2] : memref<128x128xf32, #tpu.memory_space<vmem>>, vector<128x128xf32>
    %cst = arith.constant dense<0.000000e+00> : vector<16x128xf32>
    %2 = tpu.matmul %0, %1, %cst {dimension_numbers = #tpu.dot_dimension_numbers<[1], [0], [0], [1], [0, 0, 1, 1], [], []>} : vector<16x128xf32>, vector<128x128xf32>, vector<16x128xf32> -> vector<16x128xf32>
    %c0_3 = arith.constant 0 : index
    %c0_4 = arith.constant 0 : index
    %3 = vector.load %arg3[%c0_3, %c0_4] : memref<1x128xf32, #tpu.memory_space<vmem>>, vector<1x128xf32>
    %4 = vector.broadcast %3 : vector<1x128xf32> to vector<16x128xf32>
    %5 = arith.addf %2, %4 : vector<16x128xf32>
    %cst_5 = arith.constant 0.000000e+00 : f32
    %6 = vector.broadcast %cst_5 : f32 to vector<16x128xf32>
    %7 = arith.maximumf %5, %6 : vector<16x128xf32>
    %c0_6 = arith.constant 0 : index
    %c0_7 = arith.constant 0 : index
    %8 = vector.load %arg4[%c0_6, %c0_7] : memref<128x128xf32, #tpu.memory_space<vmem>>, vector<128x128xf32>
    %cst_8 = arith.constant dense<0.000000e+00> : vector<16x128xf32>
    %9 = tpu.matmul %7, %8, %cst_8 {dimension_numbers = #tpu.dot_dimension_numbers<[1], [0], [0], [1], [0, 0, 1, 1], [], []>} : vector<16x128xf32>, vector<128x128xf32>, vector<16x128xf32> -> vector<16x128xf32>
    %c0_9 = arith.constant 0 : index
    %c0_10 = arith.constant 0 : index
    %10 = vector.load %arg5[%c0_9, %c0_10] : memref<1x128xf32, #tpu.memory_space<vmem>>, vector<1x128xf32>
    %11 = vector.broadcast %10 : vector<1x128xf32> to vector<16x128xf32>
    %12 = arith.addf %9, %11 : vector<16x128xf32>
    %13 = arith.addf %0, %12 : vector<16x128xf32>
    %c0_11 = arith.constant 0 : index
    %c0_12 = arith.constant 0 : index
    %14 = vector.load %arg6[%c0_11, %c0_12] : memref<16x128xf32, #tpu.memory_space<vmem>>, vector<16x128xf32>
    tpu.vector_store %arg6[%c0_11, %c0_12], %13 {strides = array<i32>} : memref<16x128xf32, #tpu.memory_space<vmem>>, vector<16x128xf32>,
    return
  }
  func.func @transform_0(%arg0: i32) -> (i32, i32) {
    %c0_i32 = arith.constant 0 : i32
    %c0_i32_0 = arith.constant 0 : i32
    return %arg0, %c0_i32 : i32, i32
  }
  func.func @transform_1(%arg0: i32) -> (i32, i32) {
    %c0_i32 = arith.constant 0 : i32
    %c0_i32_0 = arith.constant 0 : i32
    %c0_i32_1 = arith.constant 0 : i32
    return %c0_i32, %c0_i32_0 : i32, i32
  }
  func.func @transform_2(%arg0: i32) -> (i32, i32) {
    %c0_i32 = arith.constant 0 : i32
    %c0_i32_0 = arith.constant 0 : i32
    %c0_i32_1 = arith.constant 0 : i32
    return %c0_i32, %c0_i32_0 : i32, i32
  }
  func.func @transform_3(%arg0: i32) -> (i32, i32) {
    %c0_i32 = arith.constant 0 : i32
    %c0_i32_0 = arith.constant 0 : i32
    %c0_i32_1 = arith.constant 0 : i32
    return %c0_i32, %c0_i32_0 : i32, i32
  }
  func.func @transform_4(%arg0: i32) -> (i32, i32) {
    %c0_i32 = arith.constant 0 : i32
    %c0_i32_0 = arith.constant 0 : i32
    %c0_i32_1 = arith.constant 0 : i32
    return %c0_i32, %c0_i32_0 : i32, i32
  }
  func.func @transform_5(%arg0: i32) -> (i32, i32) {
    %c0_i32 = arith.constant 0 : i32
    %c0_i32_0 = arith.constant 0 : i32
    return %arg0, %c0_i32 : i32, i32
  }
}

</mosaic_0001>

<llo_original>
// kernel: residual_block.1
$region0: #{residual_block.1}
  #allocation0 [shape = 'u32[]', space=smem, size = 0x4, offset = 0x4, fixed_abs, tag = 'smem constant byte address 0x4 - core index']
  #allocation1 [shape = 'u32[144,128]{1,0:T(1,128)}', space=vmem, size = 0x12000, scoped, tag = 'internal scratch']
  %s0 = inlined_call_operand.vmem [shape: f32[32,128], index: 0, kind: input, shape index: {}]
  %s1 = inlined_call_operand.vmem [shape: f32[128,128], index: 1, kind: input, shape index: {}]
  %s2 = inlined_call_operand.vmem [shape: f32[1,128], index: 2, kind: input, shape index: {}]
  %s3 = inlined_call_operand.vmem [shape: f32[128,128], index: 3, kind: input, shape index: {}]
  %s4 = inlined_call_operand.vmem [shape: f32[1,128], index: 4, kind: input, shape index: {}]
  %s5 = inlined_call_operand.vmem [shape: f32[32,128], index: 5, kind: output, shape index: {}]
  %s6 = sld [smem:[#allocation0]]
  $region53: #{residual_block.1} parent=0
    _
  %s8 = ssub.s32 1, %s6
  %s9 = scalar_select 0, %s8, %s6
  loop: start=0, step=1, limit=4
  $region2: #{residual_block.1} parent=0 // loop_pre_header
    _
  $region3: #{residual_block.1} parent=0 // loop_header
    %s11 = sphi 0, %s15
    %p12 = scmp.ge.s32.totalorder %s11, 4
    %s21 = sphi 0, %s23
    %s24 = sphi 0, %s21
    %s25 = sphi 0, %s24
    %s41 = sphi 0, %s25
    %s45 = sphi 0, %s45
    %s47 = sphi 0, %s45
    %s48 = sphi 0, %s47
    %s62 = sphi 0, %s48
    %s66 = sphi 0, %s66
    %s68 = sphi 0, %s66
    %s69 = sphi 0, %s68
    %s83 = sphi 0, %s69
    %s87 = sphi 0, %s87
    %s89 = sphi 0, %s87
    %s90 = sphi 0, %s89
    %s104 = sphi 0, %s90
    %s108 = sphi 0, %s108
    %s110 = sphi 0, %s108
    %s111 = sphi 0, %s110
    %s125 = sphi 0, %s111
    %s131 = sphi 0, %s133
    %s134 = sphi 0, %s131
    %s135 = sphi 0, %s134
    %s151 = sphi 0, %s135
  $region4: #{residual_block.1} parent=0 // loop_header_branch
    %14 = sbr.rel (%p12) target = $region8
  $region5: #{residual_block.1} parent=0 // loop_body
    %s16 = ssub.s32 %s11, 1
    %s17 = ssub.s32 %s11, 2
    %s18 = sadd.s32 %s11, 1
    %s19 = ssub.s32 %s11, %s18
    %p20 = scmp.eq.s32.totalorder %s19, 0
    %s22 = sadd.s32 %s21, 1
    %s23 = scalar_select %p20, %s21, %s22
    %p26 = pneg %p20
    %p27 = scmp.eq.s32.totalorder %s11, 1
    %p28 = por %p26, %p27
    %p29 = scmp.ne.s32.totalorder %s21, %s24
    %p30 = scmp.eq.s32.totalorder %s11, 0
    %p31 = por %p29, %p30
    %p32 = scmp.ne.s32.totalorder %s21, %s24
    %p33 = scmp.eq.s32.totalorder %s16, 1
    %p34 = por %p32, %p33
    %p35 = scmp.ne.s32.totalorder %s24, %s25
    %p36 = scmp.eq.s32.totalorder %s16, 0
    %p37 = por %p35, %p36
    %p38 = scmp.ne.s32.totalorder %s24, %s25
    %p39 = scmp.eq.s32.totalorder %s17, 1
    %p40 = por %p38, %p39
    %p42 = scmp.ne.s32.totalorder %s25, %s41
    %p43 = scmp.eq.s32.totalorder %s17, 0
    %p44 = por %p42, %p43
    %s46 = sadd.s32 %s45, 1
    %p49 = scmp.eq.s32.totalorder %s11, 1
    %p50 = scmp.ne.s32.totalorder %s45, %s47
    %p51 = scmp.eq.s32.totalorder %s11, 0
    %p52 = por %p50, %p51
    %p53 = scmp.ne.s32.totalorder %s45, %s47
    %p54 = scmp.eq.s32.totalorder %s16, 1
    %p55 = por %p53, %p54
    %p56 = scmp.ne.s32.totalorder %s47, %s48
    %p57 = scmp.eq.s32.totalorder %s16, 0
    %p58 = por %p56, %p57
    %p59 = scmp.ne.s32.totalorder %s47, %s48
    %p60 = scmp.eq.s32.totalorder %s17, 1
    %p61 = por %p59, %p60
    %p63 = scmp.ne.s32.totalorder %s48, %s62
    %p64 = scmp.eq.s32.totalorder %s17, 0
    %p65 = por %p63, %p64
    %s67 = sadd.s32 %s66, 1
    %p70 = scmp.eq.s32.totalorder %s11, 1
    %p71 = scmp.ne.s32.totalorder %s66, %s68
    %p72 = scmp.eq.s32.totalorder %s11, 0
    %p73 = por %p71, %p72
    %p74 = scmp.ne.s32.totalorder %s66, %s68
    %p75 = scmp.eq.s32.totalorder %s16, 1
    %p76 = por %p74, %p75
    %p77 = scmp.ne.s32.totalorder %s68, %s69
    %p78 = scmp.eq.s32.totalorder %s16, 0
    %p79 = por %p77, %p78
    %p80 = scmp.ne.s32.totalorder %s68, %s69
    %p81 = scmp.eq.s32.totalorder %s17, 1
    %p82 = por %p80, %p81
    %p84 = scmp.ne.s32.totalorder %s69, %s83
    %p85 = scmp.eq.s32.totalorder %s17, 0
    %p86 = por %p84, %p85
    %s88 = sadd.s32 %s87, 1
    %p91 = scmp.eq.s32.totalorder %s11, 1
    %p92 = scmp.ne.s32.totalorder %s87, %s89
    %p93 = scmp.eq.s32.totalorder %s11, 0
    %p94 = por %p92, %p93
    %p95 = scmp.ne.s32.totalorder %s87, %s89
    %p96 = scmp.eq.s32.totalorder %s16, 1
    %p97 = por %p95, %p96
    %p98 = scmp.ne.s32.totalorder %s89, %s90
    %p99 = scmp.eq.s32.totalorder %s16, 0
    %p100 = por %p98, %p99
    %p101 = scmp.ne.s32.totalorder %s89, %s90
    %p102 = scmp.eq.s32.totalorder %s17, 1
    %p103 = por %p101, %p102
    %p105 = scmp.ne.s32.totalorder %s90, %s104
    %p106 = scmp.eq.s32.totalorder %s17, 0
    %p107 = por %p105, %p106
    %s109 = sadd.s32 %s108, 1
    %p112 = scmp.eq.s32.totalorder %s11, 1
    %p113 = scmp.ne.s32.totalorder %s108, %s110
    %p114 = scmp.eq.s32.totalorder %s11, 0
    %p115 = por %p113, %p114
    %p116 = scmp.ne.s32.totalorder %s108, %s110
    %p117 = scmp.eq.s32.totalorder %s16, 1
    %p118 = por %p116, %p117
    %p119 = scmp.ne.s32.totalorder %s110, %s111
    %p120 = scmp.eq.s32.totalorder %s16, 0
    %p121 = por %p119, %p120
    %p122 = scmp.ne.s32.totalorder %s110, %s111
    %p123 = scmp.eq.s32.totalorder %s17, 1
    %p124 = por %p122, %p123
    %p126 = scmp.ne.s32.totalorder %s111, %s125
    %p127 = scmp.eq.s32.totalorder %s17, 0
    %p128 = por %p126, %p127
    %s129 = ssub.s32 %s11, %s18
    %p130 = scmp.eq.s32.totalorder %s129, 0
    %s132 = sadd.s32 %s131, 1
    %s133 = scalar_select %p130, %s131, %s132
    %p136 = pneg %p130
    %p137 = scmp.eq.s32.totalorder %s11, 1
    %p138 = por %p136, %p137
    %p139 = scmp.ne.s32.totalorder %s131, %s134
    %p140 = scmp.eq.s32.totalorder %s11, 0
    %p141 = por %p139, %p140
    %p142 = scmp.ne.s32.totalorder %s131, %s134
    %p143 = scmp.eq.s32.totalorder %s16, 1
    %p144 = por %p142, %p143
    %p145 = scmp.ne.s32.totalorder %s134, %s135
    %p146 = scmp.eq.s32.totalorder %s16, 0
    %p147 = por %p145, %p146
    %p148 = scmp.ne.s32.totalorder %s134, %s135
    %p149 = scmp.eq.s32.totalorder %s17, 1
    %p150 = por %p148, %p149
    %p152 = scmp.ne.s32.totalorder %s135, %s151
    %p153 = scmp.eq.s32.totalorder %s17, 0
    %p154 = por %p152, %p153
    %p155 = scmp.le.s32.totalorder 1, %s11
    %p156 = scmp.lt.s32.totalorder %s11, 3
    %p157 = pnand %p155, %p156
    %p158 = pneg %p157
    // Predicated region
    $region9: #{residual_block.1} parent=5 // pred_check
      _
    $region10: #{residual_block.1} parent=5 // pred_check_branch
      %160 = sbr.rel (%p157) target = $region12
    $region11: #{residual_block.1} parent=5 // pred_region
      %s161 = ssub.s32 %s11, 1
      // Predicated region
      $region13: #{residual_block.1} parent=11 // pred_check
        %p162 = pneg %p58
      $region14: #{residual_block.1} parent=11 // pred_check_branch
        %164 = sbr.rel (%p162) target = $region16
      $region15: #{residual_block.1} parent=11 // pred_region
        _
      $region16: #{residual_block.1} parent=11 // pred_fallthru
        _
      // Predicated region
      $region17: #{residual_block.1} parent=11 // pred_check
        %p165 = pneg %p79
      $region18: #{residual_block.1} parent=11 // pred_check_branch
        %167 = sbr.rel (%p165) target = $region20
      $region19: #{residual_block.1} parent=11 // pred_region
        _
      $region20: #{residual_block.1} parent=11 // pred_fallthru
        _
      // Predicated region
      $region21: #{residual_block.1} parent=11 // pred_check
        %p168 = pneg %p100
      $region22: #{residual_block.1} parent=11 // pred_check_branch
        %170 = sbr.rel (%p168) target = $region24
      $region23: #{residual_block.1} parent=11 // pred_region
        _
      $region24: #{residual_block.1} parent=11 // pred_fallthru
        _
      // Predicated region
      $region25: #{residual_block.1} parent=11 // pred_check
        %p171 = pneg %p121
      $region26: #{residual_block.1} parent=11 // pred_check_branch
        %173 = sbr.rel (%p171) target = $region28
      $region27: #{residual_block.1} parent=11 // pred_region
        _
      $region28: #{residual_block.1} parent=11 // pred_fallthru
        _
    $region12: #{residual_block.1} parent=5 // pred_fallthru
      _
    %p174 = scmp.lt.s32.totalorder %s11, 2
    // Predicated region
    $region29: #{residual_block.1} parent=5 // pred_check
      %p175 = pneg %p174
    $region30: #{residual_block.1} parent=5 // pred_check_branch
      %177 = sbr.rel (%p175) target = $region32
    $region31: #{residual_block.1} parent=5 // pred_region
      // Predicated region
      $region33: #{residual_block.1} parent=31 // pred_check
        %p178 = pneg %p31
      $region34: #{residual_block.1} parent=31 // pred_check_branch
        %180 = sbr.rel (%p178) target = $region36
      $region35: #{residual_block.1} parent=31 // pred_region
        %s181 = smul.u32 2, %s11
        %p182 = scmp.lt.s32.totalorder %s181, 3
        %s183 = scalar_select %p182, %s181, 3
        %s184 = smul.addr %s183, 8
        %s185 = scalar_lea.vmem %s0, %s184
        %s186 = smul.u32 2, %s11
      $region36: #{residual_block.1} parent=31 // pred_fallthru
        _
    $region32: #{residual_block.1} parent=5 // pred_fallthru
      _
    %p187 = scmp.le.s32.totalorder 1, %s11
    %p188 = scmp.lt.s32.totalorder %s11, 3
    %p189 = pnand %p187, %p188
    %p190 = pneg %p189
    // Predicated region
    $region37: #{residual_block.1} parent=5 // pred_check
      _
    $region38: #{residual_block.1} parent=5 // pred_check_branch
      %192 = sbr.rel (%p189) target = $region40
    $region39: #{residual_block.1} parent=5 // pred_region
      %s193 = ssub.s32 %s11, 1
      %s194 = smul.u32 2, %s16
      %p195 = scmp.lt.s32.totalorder %s194, 3
      %s196 = scalar_select %p195, %s194, 3
      %s197 = smul.addr %s196, 8
      %s198 = scalar_lea.vmem %s0, %s197
      %p199 = pneg %p37
      %p200 = pneg %p34
      %p201 = pneg %p58
      %p202 = pneg %p55
      %p203 = pneg %p79
      %p204 = pneg %p76
      %p205 = pneg %p100
      %p206 = pneg %p97
      %p207 = pneg %p121
      %p208 = pneg %p118
      %p209 = pneg %p147
      %p210 = pneg %p144
      %s211 = smul.u32 2, %s16
      %p212 = scmp.lt.s32.totalorder %s211, 3
      %s213 = scalar_select %p212, %s211, 3
      %s214 = smul.addr %s213, 8
      %s215 = scalar_lea.vmem %s5, %s214
      %s216 = smul.u32 2, %s16
      %p217 = scmp.lt.s32.totalorder %s216, 3
      %s218 = scalar_select %p217, %s216, 3
      %s219 = smul.addr %s218, 8
      %s220 = scalar_lea.vmem %s0, %s219
      %s221 = smul.u32 2, %s16
      %s222 = smul.u32 2, %s16
      %p223 = scmp.lt.s32.totalorder %s222, 3
      %s224 = scalar_select %p223, %s222, 3
      %s225 = smul.addr %s224, 8
      %s226 = scalar_lea.vmem %s5, %s225
      %s227 = smul.u32 2, %s16
      %v228 = vld [vmem:[%s220] sm:$0xff]
      %v229 = vld [vmem:[%s220 + $0x8] sm:$0xff]
      %v230 = vld [vmem:[%s1] sm:$0xff]
      %v231 = vld [vmem:[%s1 + $0x8] sm:$0xff]
      %v232 = vld [vmem:[%s1 + $0x10] sm:$0xff]
      %v233 = vld [vmem:[%s1 + $0x18] sm:$0xff]
      %v234 = vld [vmem:[%s1 + $0x20] sm:$0xff]
      %v235 = vld [vmem:[%s1 + $0x28] sm:$0xff]
      %v236 = vld [vmem:[%s1 + $0x30] sm:$0xff]
      %v237 = vld [vmem:[%s1 + $0x38] sm:$0xff]
      %v238 = vld [vmem:[%s1 + $0x40] sm:$0xff]
      %v239 = vld [vmem:[%s1 + $0x48] sm:$0xff]
      %v240 = vld [vmem:[%s1 + $0x50] sm:$0xff]
      %v241 = vld [vmem:[%s1 + $0x58] sm:$0xff]
      %v242 = vld [vmem:[%s1 + $0x60] sm:$0xff]
      %v243 = vld [vmem:[%s1 + $0x68] sm:$0xff]
      %v244 = vld [vmem:[%s1 + $0x70] sm:$0xff]
      %v245 = vld [vmem:[%s1 + $0x78] sm:$0xff]
      %v246 = vld [vmem:[%s2] sm:$0x1]
      %v248 = vlaneseq
      %v249 = vshrl.u32 %v248, 7
      %v250 = vsub.s32 0, %v249
      %v251 = vrot.slane %v246, %v250
      %253 = vmatprep.subr.mxu0 0.0
      %254 = vmatpush1.msra.mxu0 %v230
      %255 = vmatprep.subr.mxu0 0.0
      %256 = vmatpush1.msra.mxu0 %v231
      %257 = vmatprep.subr.mxu0 0.0
      %258 = vmatpush1.msra.mxu0 %v232
      %259 = vmatprep.subr.mxu0 0.0
      %260 = vmatpush1.msra.mxu0 %v233
      %261 = vmatprep.subr.mxu0 0.0
      %262 = vmatpush1.msra.mxu0 %v234
      %263 = vmatprep.subr.mxu0 0.0
      %264 = vmatpush1.msra.mxu0 %v235
      %265 = vmatprep.subr.mxu0 0.0
      %266 = vmatpush1.msra.mxu0 %v236
      %267 = vmatprep.subr.mxu0 0.0
      %268 = vmatpush1.msra.mxu0 %v237
      %269 = vmatprep.subr.mxu0 0.0
      %270 = vmatpush1.msra.mxu0 %v238
      %271 = vmatprep.subr.mxu0 0.0
      %272 = vmatpush1.msra.mxu0 %v239
      %273 = vmatprep.subr.mxu0 0.0
      %274 = vmatpush1.msra.mxu0 %v240
      %275 = vmatprep.subr.mxu0 0.0
      %276 = vmatpush1.msra.mxu0 %v241
      %277 = vmatprep.subr.mxu0 0.0
      %278 = vmatpush1.msra.mxu0 %v242
      %279 = vmatprep.subr.mxu0 0.0
      %280 = vmatpush1.msra.mxu0 %v243
      %281 = vmatprep.subr.mxu0 0.0
      %282 = vmatpush1.msra.mxu0 %v244
      %283 = vmatprep.subr.mxu0 0.0
      %284 = vmatpush1.msra.mxu0 %v245
      %285 = vmatprep.subr.mxu0 0.0
      %286 = vmatpush1.msra.mxu0 0.0
      %287 = vmatprep.subr.mxu0 0.0
      %288 = vmatpush1.msra.mxu0 0.0
      %289 = vmatprep.subr.mxu0 0.0
      %290 = vmatpush1.msra.mxu0 0.0
      %291 = vmatprep.subr.mxu0 0.0
      %292 = vmatpush1.msra.mxu0 0.0
      %293 = vmatprep.subr.mxu0 0.0
      %294 = vmatpush1.msra.mxu0 0.0
      %295 = vmatprep.subr.mxu0 0.0
      %296 = vmatpush1.msra.mxu0 0.0
      %297 = vmatprep.subr.mxu0 0.0
      %298 = vmatpush1.msra.mxu0 0.0
      %299 = vmatprep.subr.mxu0 0.0
      %300 = vmatpush1.msra.mxu0 0.0
      %301 = vmatprep.subr.mxu0 0.0
      %302 = vmatpush1.msra.mxu0 0.0
      %303 = vmatprep.subr.mxu0 0.0
      %304 = vmatpush1.msra.mxu0 0.0
      %305 = vmatprep.subr.mxu0 0.0
      %306 = vmatpush1.msra.mxu0 0.0
      %307 = vmatprep.subr.mxu0 0.0
      %308 = vmatpush1.msra.mxu0 0.0
      %309 = vmatprep.subr.mxu0 0.0
      %310 = vmatpush1.msra.mxu0 0.0
      %311 = vmatprep.subr.mxu0 0.0
      %312 = vmatpush1.msra.mxu0 0.0
      %313 = vmatprep.subr.mxu0 0.0
      %314 = vmatpush1.msra.mxu0 0.0
      %315 = vmatprep.subr.mxu0 0.0
      %316 = vmatpush1.msra.mxu0 0.0
      %317 = vmatprep.mubr.f32.mxu0 0.0
      %318 = vmatmul.mubr.f32.gmra.mrb[0].mxu0 %v228
      %v319 = vpop.f32.mrb[0].mxu0
      %v320 = vadd.f32 %v251, %v319
      %v321 = vpop.f32.mrb[0].mxu0
      %322 = vmatprep.mubr.f32.mxu0 0.0
      %323 = vmatmul.mubr.f32.gmra.mrb[0].mxu0 %v229
      %v324 = vpop.f32.mrb[0].mxu0
      %v325 = vadd.f32 %v251, %v324
      %v326 = vpop.f32.mrb[0].mxu0
      %327 = vdwg.mxu0
      %v328 = vmax.f32 %v320, 0.0
      %v329 = vmax.f32 %v325, 0.0
      %v330 = vld [vmem:[%s3] sm:$0xff]
      %v331 = vld [vmem:[%s3 + $0x8] sm:$0xff]
      %v332 = vld [vmem:[%s3 + $0x10] sm:$0xff]
      %v333 = vld [vmem:[%s3 + $0x18] sm:$0xff]
      %v334 = vld [vmem:[%s3 + $0x20] sm:$0xff]
      %v335 = vld [vmem:[%s3 + $0x28] sm:$0xff]
      %v336 = vld [vmem:[%s3 + $0x30] sm:$0xff]
      %v337 = vld [vmem:[%s3 + $0x38] sm:$0xff]
      %v338 = vld [vmem:[%s3 + $0x40] sm:$0xff]
      %v339 = vld [vmem:[%s3 + $0x48] sm:$0xff]
      %v340 = vld [vmem:[%s3 + $0x50] sm:$0xff]
      %v341 = vld [vmem:[%s3 + $0x58] sm:$0xff]
      %v342 = vld [vmem:[%s3 + $0x60] sm:$0xff]
      %v343 = vld [vmem:[%s3 + $0x68] sm:$0xff]
      %v344 = vld [vmem:[%s3 + $0x70] sm:$0xff]
      %v345 = vld [vmem:[%s3 + $0x78] sm:$0xff]
      %v346 = vld [vmem:[%s4] sm:$0x1]
      %v348 = vlaneseq
      %v349 = vshrl.u32 %v348, 7
      %v350 = vsub.s32 0, %v349
      %v351 = vrot.slane %v346, %v350
      %353 = vmatprep.subr.mxu0 0.0
      %354 = vmatpush1.msra.mxu0 %v330
      %355 = vmatprep.subr.mxu0 0.0
      %356 = vmatpush1.msra.mxu0 %v331
      %357 = vmatprep.subr.mxu0 0.0
      %358 = vmatpush1.msra.mxu0 %v332
      %359 = vmatprep.subr.mxu0 0.0
      %360 = vmatpush1.msra.mxu0 %v333
      %361 = vmatprep.subr.mxu0 0.0
      %362 = vmatpush1.msra.mxu0 %v334
      %363 = vmatprep.subr.mxu0 0.0
      %364 = vmatpush1.msra.mxu0 %v335
      %365 = vmatprep.subr.mxu0 0.0
      %366 = vmatpush1.msra.mxu0 %v336
      %367 = vmatprep.subr.mxu0 0.0
      %368 = vmatpush1.msra.mxu0 %v337
      %369 = vmatprep.subr.mxu0 0.0
      %370 = vmatpush1.msra.mxu0 %v338
      %371 = vmatprep.subr.mxu0 0.0
      %372 = vmatpush1.msra.mxu0 %v339
      %373 = vmatprep.subr.mxu0 0.0
      %374 = vmatpush1.msra.mxu0 %v340
      %375 = vmatprep.subr.mxu0 0.0
      %376 = vmatpush1.msra.mxu0 %v341
      %377 = vmatprep.subr.mxu0 0.0
      %378 = vmatpush1.msra.mxu0 %v342
      %379 = vmatprep.subr.mxu0 0.0
      %380 = vmatpush1.msra.mxu0 %v343
      %381 = vmatprep.subr.mxu0 0.0
      %382 = vmatpush1.msra.mxu0 %v344
      %383 = vmatprep.subr.mxu0 0.0
      %384 = vmatpush1.msra.mxu0 %v345
      %385 = vmatprep.subr.mxu0 0.0
      %386 = vmatpush1.msra.mxu0 0.0
      %387 = vmatprep.subr.mxu0 0.0
      %388 = vmatpush1.msra.mxu0 0.0
      %389 = vmatprep.subr.mxu0 0.0
      %390 = vmatpush1.msra.mxu0 0.0
      %391 = vmatprep.subr.mxu0 0.0
      %392 = vmatpush1.msra.mxu0 0.0
      %393 = vmatprep.subr.mxu0 0.0
      %394 = vmatpush1.msra.mxu0 0.0
      %395 = vmatprep.subr.mxu0 0.0
      %396 = vmatpush1.msra.mxu0 0.0
      %397 = vmatprep.subr.mxu0 0.0
      %398 = vmatpush1.msra.mxu0 0.0
      %399 = vmatprep.subr.mxu0 0.0
      %400 = vmatpush1.msra.mxu0 0.0
      %401 = vmatprep.subr.mxu0 0.0
      %402 = vmatpush1.msra.mxu0 0.0
      %403 = vmatprep.subr.mxu0 0.0
      %404 = vmatpush1.msra.mxu0 0.0
      %405 = vmatprep.subr.mxu0 0.0
      %406 = vmatpush1.msra.mxu0 0.0
      %407 = vmatprep.subr.mxu0 0.0
      %408 = vmatpush1.msra.mxu0 0.0
      %409 = vmatprep.subr.mxu0 0.0
      %410 = vmatpush1.msra.mxu0 0.0
      %411 = vmatprep.subr.mxu0 0.0
      %412 = vmatpush1.msra.mxu0 0.0
      %413 = vmatprep.subr.mxu0 0.0
      %414 = vmatpush1.msra.mxu0 0.0
      %415 = vmatprep.subr.mxu0 0.0
      %416 = vmatpush1.msra.mxu0 0.0
      %417 = vmatprep.mubr.f32.mxu0 0.0
      %418 = vmatmul.mubr.f32.gmra.mrb[0].mxu0 %v328
      %v419 = vpop.f32.mrb[0].mxu0
      %v420 = vadd.f32 %v351, %v419
      %v421 = vpop.f32.mrb[0].mxu0
      %422 = vmatprep.mubr.f32.mxu0 0.0
      %423 = vmatmul.mubr.f32.gmra.mrb[0].mxu0 %v329
      %v424 = vpop.f32.mrb[0].mxu0
      %v425 = vadd.f32 %v351, %v424
      %v426 = vpop.f32.mrb[0].mxu0
      %427 = vdwg.mxu0
      %v428 = vadd.f32 %v228, %v420
      %v429 = vadd.f32 %v229, %v425
      %430 = vst [vmem:[%s226] sm:$0xff] %v428
      %431 = vst [vmem:[%s226 + $0x8] sm:$0xff] %v429
      %s432 = smul.u32 2, %s16
      %p433 = scmp.lt.s32.totalorder %s432, 3
      %s434 = scalar_select %p433, %s432, 3
      %s435 = smul.addr %s434, 8
      %s436 = scalar_lea.vmem %s5, %s435
      // Predicated region
      $region41: #{residual_block.1} parent=39 // pred_check
        %p437 = pneg %p144
      $region42: #{residual_block.1} parent=39 // pred_check_branch
        %439 = sbr.rel (%p437) target = $region44
      $region43: #{residual_block.1} parent=39 // pred_region
        %s440 = smul.u32 2, %s16
      $region44: #{residual_block.1} parent=39 // pred_fallthru
        _
    $region40: #{residual_block.1} parent=5 // pred_fallthru
      _
    %p441 = scmp.le.s32.totalorder 2, %s11
    // Predicated region
    $region45: #{residual_block.1} parent=5 // pred_check
      %p442 = pneg %p441
    $region46: #{residual_block.1} parent=5 // pred_check_branch
      %444 = sbr.rel (%p442) target = $region48
    $region47: #{residual_block.1} parent=5 // pred_region
      %s445 = ssub.s32 %s11, 2
      // Predicated region
      $region49: #{residual_block.1} parent=47 // pred_check
        %p446 = pneg %p150
      $region50: #{residual_block.1} parent=47 // pred_check_branch
        %448 = sbr.rel (%p446) target = $region52
      $region51: #{residual_block.1} parent=47 // pred_region
        %s449 = smul.u32 2, %s17
        %p450 = scmp.lt.s32.totalorder %s449, 3
        %s451 = scalar_select %p450, %s449, 3
        %s452 = smul.addr %s451, 8
        %s453 = scalar_lea.vmem %s5, %s452
      $region52: #{residual_block.1} parent=47 // pred_fallthru
        _
    $region48: #{residual_block.1} parent=5 // pred_fallthru
      _
  $region6: #{residual_block.1} parent=0 // loop_footer
    %s15 = sadd.s32 1, %s11
  $region7: #{residual_block.1} parent=0 // loop_footer_branch
    %10 = sbr.rel target = $region3
  $region8: #{residual_block.1} parent=0 // loop_exit
    _

</llo_original>
